<compile_context>
chip_gen: v7x
topology: tpu7x:2x2x1
jax: 0.10.0
libtpu: 0.0.40
codegen_flags: <defaults>
</compile_context>

<pallas_src>
import functools

import jax
import jax.numpy as jnp
from jax.experimental import pallas as pl
from jax.experimental.pallas import tpu as pltpu

_SQRT_2_OVER_PI = 0.7978845608028654   # matches jax.nn.gelu(approximate=True)
_GELU_C1 = 0.044715


def _vision_loss_kernel(x_ref, wa_t_ref, ba_ref, hwd_ref, bd_ref, t_ref,
                        out_ref, acc_bce, acc_pt, acc_p, *, dense, tn):
    """grid = (B, P, nt).  Adapter -> GELU (decoder weight folded) -> BCE / dice partials.

    x_ref   : [1, C, TN]            feature tile (channels on sublanes, pixels on lanes)
    wa_t_ref: [D, C]                adapter weight, pre-transposed (compute dtype)
    ba_ref  : [D, 1]  f32           adapter bias
    hwd_ref : [D, 1]                0.5 * decoder weight (compute dtype), folded into GELU
    bd_ref  : [1, 1]  SMEM f32      decoder bias scalar
    t_ref   : [1, 1, TN] / [1, 8, TN//8]  f32 target tile
    out_ref : [1, 1, 3] SMEM f32    per-(batch, split) (bce_sum, intersection, p_sum)
    acc_*   : VMEM f32              running vector partials (reduced once in finalize)
    """
    n = pl.program_id(2)

    @pl.when(n == 0)
    def _init():
        acc_bce[...] = jnp.zeros_like(acc_bce)
        acc_pt[...] = jnp.zeros_like(acc_pt)
        acc_p[...] = jnp.zeros_like(acc_p)

    x = x_ref[0]                      # [C, TN]  compute dtype
    t = t_ref[0]                      # [1, TN] or [8, TN//8]  f32

    # adapter Linear(C -> D), computed transposed so pixels stay on the lane axis.
    h = (jnp.dot(wa_t_ref[...], x, preferred_element_type=jnp.float32)
         + ba_ref[...]).astype(x.dtype)                                    # [D, TN]

    # tanh-GELU with the decoder weight folded in:  (0.5*wd)*h*(1+tanh(...)) == gelu(h)*wd
    inner = jnp.tanh(_SQRT_2_OVER_PI * (h + _GELU_C1 * h * h * h))
    weighted = (hwd_ref[...] * h) * (1.0 + inner)                          # [D, TN]

    # decoder reduce (D -> 1), accumulated in f32; z stays lane-dense.
    z = jnp.sum(weighted.astype(jnp.float32), axis=0, keepdims=True) + bd_ref[0, 0]
    if dense:
        # sublane-densify the per-pixel stage (one relayout, then full 8x128 vregs).
        z = z.reshape(8, tn // 8)

    # numerically-stable BCE-with-logits + sigmoid sharing one exp(-|z|).
    e = jnp.exp(-jnp.abs(z))
    bce = jnp.maximum(z, 0.0) - z * t + jnp.log1p(e)
    inv = pl.reciprocal(1.0 + e, approx=True)
    p = jnp.where(z >= 0.0, 1.0, e) * inv            # sigmoid(z)

    # vector accumulation only (no per-step cross-lane reduce, no SMEM scalar stores).
    acc_bce[...] += bce
    acc_pt[...] += p * t
    acc_p[...] += p

    @pl.when(n == pl.num_programs(2) - 1)
    def _finalize():
        out_ref[0, 0, 0] = jnp.sum(acc_bce[...])
        out_ref[0, 0, 1] = jnp.sum(acc_pt[...])
        out_ref[0, 0, 2] = jnp.sum(acc_p[...])


def _bf16_activations_supported() -> bool:
    """bf16 VPU/EUP exists on v6e / v7x; on v5e and older the cast is pure overhead."""
    try:
        kind = jax.devices()[0].device_kind.lower()
    except Exception:
        return False
    return ("v6" in kind) or ("v7" in kind) or ("7x" in kind)


def vision_loss(feat_nchw, target_mask, wa, ba, wd, bd, compute_dtype=None):
    """feat_nchw: [B, C, H, W]; target_mask: [B, H, W] in {0, 1}."""
    B, C, H, W = feat_nchw.shape
    N = H * W
    D = wa.shape[1]

    if compute_dtype is None:
        compute_dtype = jnp.bfloat16 if _bf16_activations_supported() else jnp.float32
    itemsize = jnp.dtype(compute_dtype).itemsize

    # ---- pixel tile: lane-aligned, capped, honest VMEM accounting ----------------------
    # double-buffered feat + target tiles, ~4 live [D, TN] activation intermediates,
    # plus the f32 z/e/p/bce temporaries and the three vector accumulators.
    per_px = 2 * (C * itemsize + 4) + 4 * D * itemsize + 8 * 4
    vmem_budget = 12 * 1024 * 1024      # conservative working set (v7x has 64 MiB VMEM)
    max_tn = 4096                       # DMA efficiency saturates well below this
    if N % 128 == 0:
        tn = 128
        while (tn * 2 <= min(N, max_tn) and N % (tn * 2) == 0
               and (tn * 2) * per_px <= vmem_budget):
            tn *= 2
    else:
        tn = N  # TODO(synk): non-128-multiple spatial sizes fall back to one full block.
    nt = N // tn

    # engage both v7x TensorCores when the batch axis alone cannot (B == 1).
    P = 2 if (B == 1 and nt >= 2 and nt % 2 == 0) else 1
    nt_in = nt // P

    dense = (tn % 1024 == 0)            # sublane-dense BCE needs TN % (8*128) == 0
    tn8 = tn // 8
    acc_shape = (8, tn8) if dense else (1, tn)

    # ---- operand layout (all host-side reshapes are free / tiny) -----------------------
    feat = feat_nchw.reshape(B, C, N).astype(compute_dtype)   # NCHW reshape: no transpose
    wa_t = wa.T.astype(compute_dtype)                         # [D, C]
    ba2 = ba.reshape(D, 1).astype(jnp.float32)
    half_wd = (0.5 * wd.reshape(D, 1)).astype(compute_dtype)  # folded into GELU epilogue
    bd2 = bd.reshape(1, 1).astype(jnp.float32)
    tgt = target_mask.reshape(B, N).astype(jnp.float32)
    t_sum = jnp.sum(tgt, axis=1)                              # per-batch sum(target)
    if dense:
        tgt = tgt.reshape(B, N // tn8, tn8)
        t_spec = pl.BlockSpec((1, 8, tn8), lambda b, p, n: (b, p * nt_in + n, 0))
    else:
        tgt = tgt.reshape(B, 1, N)
        t_spec = pl.BlockSpec((1, 1, tn), lambda b, p, n: (b, 0, p * nt_in + n))

    kernel = functools.partial(_vision_loss_kernel, dense=dense, tn=tn)

    partial = pl.pallas_call(
        kernel,
        out_shape=jax.ShapeDtypeStruct((B, P, 3), jnp.float32),
        grid_spec=pltpu.PrefetchScalarGridSpec(
            num_scalar_prefetch=0,
            grid=(B, P, nt_in),
            in_specs=[
                pl.BlockSpec((1, C, tn), lambda b, p, n: (b, 0, p * nt_in + n)),  # feat
                pl.BlockSpec((D, C), lambda b, p, n: (0, 0)),                     # wa^T
                pl.BlockSpec((D, 1), lambda b, p, n: (0, 0)),                     # ba
                pl.BlockSpec((D, 1), lambda b, p, n: (0, 0)),                     # 0.5*wd
                pl.BlockSpec(memory_space=pltpu.MemorySpace.SMEM),                # bd
                t_spec,                                                           # target
            ],
            out_specs=pl.BlockSpec((1, 1, 3), lambda b, p, n: (b, p, 0),
                                   memory_space=pltpu.MemorySpace.SMEM),
            scratch_shapes=[pltpu.VMEM(acc_shape, jnp.float32)] * 3,
        ),
        compiler_params=pltpu.CompilerParams(
            dimension_semantics=("parallel", "parallel", "arbitrary"),
            vmem_limit_bytes=32 * 1024 * 1024),
    )(feat, wa_t, ba2, half_wd, bd2, tgt)

    bce_mean = jnp.sum(partial[:, :, 0]) / jnp.float32(B * N)
    inter = jnp.sum(partial[:, :, 1], axis=1)                 # [B]
    p_sum = jnp.sum(partial[:, :, 2], axis=1)                 # [B]
    dice = 1.0 - (2.0 * inter + 1.0) / (p_sum + t_sum + 1.0)
    return bce_mean + jnp.mean(dice)


def vision_loss_ref(feat_nchw, target_mask, wa, ba, wd, bd):
    """Pure-JAX (f32) reference for correctness checking."""
    B, C, H, W = feat_nchw.shape
    N = H * W
    x = jnp.transpose(feat_nchw, (0, 2, 3, 1)).reshape(B, N, C).astype(jnp.float32)
    t = target_mask.reshape(B, N, 1).astype(jnp.float32)
    h = jax.nn.gelu(x @ wa + ba.reshape(1, 1, -1))
    z = h @ wd + bd.reshape(1, 1, 1)
    bce = jnp.maximum(z, 0.0) - z * t + jnp.log1p(jnp.exp(-jnp.abs(z)))
    p = jax.nn.sigmoid(z)
    inter = jnp.sum(p * t, axis=(1, 2))
    union = jnp.sum(p, axis=(1, 2)) + jnp.sum(t, axis=(1, 2))
    dice = 1.0 - (2.0 * inter + 1.0) / (union + 1.0)
    return jnp.mean(bce) + jnp.mean(dice)


if __name__ == "__main__":
    B, C, H, W = 2, 4, 16, 16
    D = 32

    key = jax.random.PRNGKey(0)
    k_feat, k_mask, k_wa, k_ba, k_wd, k_bd = jax.random.split(key, 6)

    feat = jax.random.normal(k_feat, (B, C, H, W), dtype=jnp.float32)
    target_mask = (jax.random.uniform(k_mask, (B, H, W)) > 0.5).astype(jnp.float32)

    wa = jax.random.normal(k_wa, (C, D), dtype=jnp.float32) * 0.1   # adapter weight
    ba = jax.random.normal(k_ba, (D,), dtype=jnp.float32) * 0.1     # adapter bias
    wd = jax.random.normal(k_wd, (D, 1), dtype=jnp.float32) * 0.1   # decoder weight
    bd = jax.random.normal(k_bd, (1,), dtype=jnp.float32) * 0.1     # decoder bias

    out = jax.block_until_ready(vision_loss(feat, target_mask, wa, ba, wd, bd))
    ref = jax.block_until_ready(vision_loss_ref(feat, target_mask, wa, ba, wd, bd))

    # bf16 activation path (v6e/v7x) + approx-reciprocal sigmoid -> slightly looser tol.
    tol = 5e-3 if _bf16_activations_supported() else 2e-3
    assert jnp.allclose(out, ref, atol=tol, rtol=tol), (out, ref)
    print("KERNEL_OK")
</pallas_src>

<mosaic_0001>
module attributes {stable_mosaic.version = 11 : i64} {
  func.func @_vision_loss_kernel(%arg0: i32, %arg1: i32, %arg2: i32, %arg3: memref<1x4x256xf32, #tpu.memory_space<vmem>>, %arg4: memref<32x4xf32, #tpu.memory_space<vmem>>, %arg5: memref<32x1xf32, #tpu.memory_space<vmem>>, %arg6: memref<32x1xf32, #tpu.memory_space<vmem>>, %arg7: memref<1x1xf32, #tpu.memory_space<smem>>, %arg8: memref<1x1x256xf32, #tpu.memory_space<vmem>>, %arg9: memref<1x1x3xf32, #tpu.memory_space<smem>>, %arg10: memref<1x256xf32, #tpu.memory_space<vmem>>, %arg11: memref<1x256xf32, #tpu.memory_space<vmem>>, %arg12: memref<1x256xf32, #tpu.memory_space<vmem>>) attributes {dimension_semantics = [#tpu.dimension_semantics<parallel>, #tpu.dimension_semantics<parallel>, #tpu.dimension_semantics<arbitrary>], iteration_bounds = array<i64: 2, 1, 1>, scalar_prefetch = 0 : i64, scratch_operands = 3 : i64, tpu.core_type = #tpu.core_type<tc>, window_params = [{transform_indices = @transform_0, window_bounds = array<i64: 1, 4, 256>}, {pipeline_mode = #tpu.pipeline_mode<synchronous>, transform_indices = @transform_1, window_bounds = array<i64: 32, 4>}, {pipeline_mode = #tpu.pipeline_mode<synchronous>, transform_indices = @transform_2, window_bounds = array<i64: 32, 1>}, {pipeline_mode = #tpu.pipeline_mode<synchronous>, transform_indices = @transform_3, window_bounds = array<i64: 32, 1>}, {transform_indices = @transform_4, window_bounds = array<i64: 1, 1>}, {transform_indices = @transform_5, window_bounds = array<i64: 1, 1, 256>}, {transform_indices = @transform_6, window_bounds = array<i64: 1, 1, 3>}]} {
    %c0_i32 = arith.constant 0 : i32
    %0 = arith.cmpi eq, %arg2, %c0_i32 : i32
    %1 = arith.extui %0 : i1 to i32
    %c0_i32_0 = arith.constant 0 : i32
    %2 = arith.cmpi ne, %1, %c0_i32_0 : i32
    scf.if %2 {
      %cst_37 = arith.constant 0.000000e+00 : f32
      %62 = vector.broadcast %cst_37 : f32 to vector<1x256xf32>
      %c0_38 = arith.constant 0 : index
      %c0_39 = arith.constant 0 : index
      %63 = vector.load %arg10[%c0_38, %c0_39] : memref<1x256xf32, #tpu.memory_space<vmem>>, vector<1x256xf32>
      tpu.vector_store %arg10[%c0_38, %c0_39], %62 {strides = array<i32>} : memref<1x256xf32, #tpu.memory_space<vmem>>, vector<1x256xf32>,
      %cst_40 = arith.constant 0.000000e+00 : f32
      %64 = vector.broadcast %cst_40 : f32 to vector<1x256xf32>
      %c0_41 = arith.constant 0 : index
      %c0_42 = arith.constant 0 : index
      %65 = vector.load %arg11[%c0_41, %c0_42] : memref<1x256xf32, #tpu.memory_space<vmem>>, vector<1x256xf32>
      tpu.vector_store %arg11[%c0_41, %c0_42], %64 {strides = array<i32>} : memref<1x256xf32, #tpu.memory_space<vmem>>, vector<1x256xf32>,
      %cst_43 = arith.constant 0.000000e+00 : f32
      %66 = vector.broadcast %cst_43 : f32 to vector<1x256xf32>
      %c0_44 = arith.constant 0 : index
      %c0_45 = arith.constant 0 : index
      %67 = vector.load %arg12[%c0_44, %c0_45] : memref<1x256xf32, #tpu.memory_space<vmem>>, vector<1x256xf32>
      tpu.vector_store %arg12[%c0_44, %c0_45], %66 {strides = array<i32>} : memref<1x256xf32, #tpu.memory_space<vmem>>, vector<1x256xf32>,
    } else {
    }
    %c0 = arith.constant 0 : index
    %c0_1 = arith.constant 0 : index
    %c0_2 = arith.constant 0 : index
    %3 = vector.load %arg3[%c0, %c0_1, %c0_2] : memref<1x4x256xf32, #tpu.memory_space<vmem>>, vector<1x4x256xf32>
    %4 = vector.shape_cast %3 : vector<1x4x256xf32> to vector<4x256xf32>
    %c0_3 = arith.constant 0 : index
    %c0_4 = arith.constant 0 : index
    %c0_5 = arith.constant 0 : index
    %5 = vector.load %arg8[%c0_3, %c0_4, %c0_5] : memref<1x1x256xf32, #tpu.memory_space<vmem>>, vector<1x1x256xf32>
    %6 = vector.shape_cast %5 : vector<1x1x256xf32> to vector<1x256xf32>
    %c0_6 = arith.constant 0 : index
    %c0_7 = arith.constant 0 : index
    %7 = vector.load %arg4[%c0_6, %c0_7] : memref<32x4xf32, #tpu.memory_space<vmem>>, vector<32x4xf32>
    %cst = arith.constant dense<0.000000e+00> : vector<32x256xf32>
    %8 = tpu.matmul %7, %4, %cst {dimension_numbers = #tpu.dot_dimension_numbers<[1], [0], [0], [1], [0, 0, 1, 1], [], []>} : vector<32x4xf32>, vector<4x256xf32>, vector<32x256xf32> -> vector<32x256xf32>
    %c0_8 = arith.constant 0 : index
    %c0_9 = arith.constant 0 : index
    %9 = vector.load %arg5[%c0_8, %c0_9] : memref<32x1xf32, #tpu.memory_space<vmem>>, vector<32x1xf32>
    %10 = vector.broadcast %9 : vector<32x1xf32> to vector<32x256xf32>
    %11 = arith.addf %8, %10 : vector<32x256xf32>
    %cst_10 = arith.constant 4.471500e-02 : f32
    %12 = vector.broadcast %cst_10 : f32 to vector<32x256xf32>
    %13 = arith.mulf %12, %11 : vector<32x256xf32>
    %14 = arith.mulf %13, %11 : vector<32x256xf32>
    %15 = arith.mulf %14, %11 : vector<32x256xf32>
    %16 = arith.addf %11, %15 : vector<32x256xf32>
    %cst_11 = arith.constant 0.797884583 : f32
    %17 = vector.broadcast %cst_11 : f32 to vector<32x256xf32>
    %18 = arith.mulf %17, %16 : vector<32x256xf32>
    %19 = math.tanh %18 : vector<32x256xf32>
    %c0_12 = arith.constant 0 : index
    %c0_13 = arith.constant 0 : index
    %20 = vector.load %arg6[%c0_12, %c0_13] : memref<32x1xf32, #tpu.memory_space<vmem>>, vector<32x1xf32>
    %21 = vector.broadcast %20 : vector<32x1xf32> to vector<32x256xf32>
    %22 = arith.mulf %21, %11 : vector<32x256xf32>
    %cst_14 = arith.constant 1.000000e+00 : f32
    %23 = vector.broadcast %cst_14 : f32 to vector<32x256xf32>
    %24 = arith.addf %23, %19 : vector<32x256xf32>
    %25 = arith.mulf %22, %24 : vector<32x256xf32>
    %cst_15 = arith.constant dense<0.000000e+00> : vector<256xf32>
    %26 = vector.multi_reduction <add>, %25, %cst_15 [0] : vector<32x256xf32> to vector<256xf32>
    %27 = vector.shape_cast %26 : vector<256xf32> to vector<1x256xf32>
    %c0_16 = arith.constant 0 : index
    %c0_17 = arith.constant 0 : index
    %28 = memref.load %arg7[%c0_16, %c0_17] : memref<1x1xf32, #tpu.memory_space<smem>>
    %29 = vector.broadcast %28 : f32 to vector<1x256xf32>
    %30 = arith.addf %27, %29 : vector<1x256xf32>
    %31 = math.absf %30 : vector<1x256xf32>
    %cst_18 = arith.constant 0.000000e+00 : f32
    %32 = vector.broadcast %cst_18 : f32 to vector<1x256xf32>
    %33 = arith.subf %32, %31 : vector<1x256xf32>
    %34 = math.exp %33 : vector<1x256xf32>
    %cst_19 = arith.constant 0.000000e+00 : f32
    %35 = vector.broadcast %cst_19 : f32 to vector<1x256xf32>
    %36 = arith.maximumf %30, %35 : vector<1x256xf32>
    %37 = arith.mulf %30, %6 : vector<1x256xf32>
    %38 = arith.subf %36, %37 : vector<1x256xf32>
    %39 = math.log1p %34 : vector<1x256xf32>
    %40 = arith.addf %38, %39 : vector<1x256xf32>
    %cst_20 = arith.constant 1.000000e+00 : f32
    %41 = vector.broadcast %cst_20 : f32 to vector<1x256xf32>
    %42 = arith.addf %41, %34 : vector<1x256xf32>
    %43 = tpu.reciprocal %42 {approx = true} : vector<1x256xf32> -> vector<1x256xf32>
    %cst_21 = arith.constant 0.000000e+00 : f32
    %44 = vector.broadcast %cst_21 : f32 to vector<1x256xf32>
    %45 = arith.cmpf oge, %30, %44 : vector<1x256xf32>
    %cst_22 = arith.constant 1.000000e+00 : f32
    %46 = vector.broadcast %cst_22 : f32 to vector<1x256xf32>
    %47 = arith.select %45, %46, %34 : vector<1x256xi1>, vector<1x256xf32>
    %48 = arith.mulf %47, %43 : vector<1x256xf32>
    %c0_23 = arith.constant 0 : index
    %c0_24 = arith.constant 0 : index
    %49 = vector.load %arg10[%c0_23, %c0_24] : memref<1x256xf32, #tpu.memory_space<vmem>>, vector<1x256xf32>
    %50 = arith.addf %49, %40 : vector<1x256xf32>
    %c0_25 = arith.constant 0 : index
    %c0_26 = arith.constant 0 : index
    %51 = vector.load %arg10[%c0_25, %c0_26] : memref<1x256xf32, #tpu.memory_space<vmem>>, vector<1x256xf32>
    tpu.vector_store %arg10[%c0_25, %c0_26], %50 {strides = array<i32>} : memref<1x256xf32, #tpu.memory_space<vmem>>, vector<1x256xf32>,
    %c0_27 = arith.constant 0 : index
    %c0_28 = arith.constant 0 : index
    %52 = vector.load %arg11[%c0_27, %c0_28] : memref<1x256xf32, #tpu.memory_space<vmem>>, vector<1x256xf32>
    %53 = arith.mulf %48, %6 : vector<1x256xf32>
    %54 = arith.addf %52, %53 : vector<1x256xf32>
    %c0_29 = arith.constant 0 : index
    %c0_30 = arith.constant 0 : index
    %55 = vector.load %arg11[%c0_29, %c0_30] : memref<1x256xf32, #tpu.memory_space<vmem>>, vector<1x256xf32>
    tpu.vector_store %arg11[%c0_29, %c0_30], %54 {strides = array<i32>} : memref<1x256xf32, #tpu.memory_space<vmem>>, vector<1x256xf32>,
    %c0_31 = arith.constant 0 : index
    %c0_32 = arith.constant 0 : index
    %56 = vector.load %arg12[%c0_31, %c0_32] : memref<1x256xf32, #tpu.memory_space<vmem>>, vector<1x256xf32>
    %57 = arith.addf %56, %48 : vector<1x256xf32>
    %c0_33 = arith.constant 0 : index
    %c0_34 = arith.constant 0 : index
    %58 = vector.load %arg12[%c0_33, %c0_34] : memref<1x256xf32, #tpu.memory_space<vmem>>, vector<1x256xf32>
    tpu.vector_store %arg12[%c0_33, %c0_34], %57 {strides = array<i32>} : memref<1x256xf32, #tpu.memory_space<vmem>>, vector<1x256xf32>,
    %c0_i32_35 = arith.constant 0 : i32
    %59 = arith.cmpi eq, %arg2, %c0_i32_35 : i32
    %60 = arith.extui %59 : i1 to i32
    %c0_i32_36 = arith.constant 0 : i32
    %61 = arith.cmpi ne, %60, %c0_i32_36 : i32
    scf.if %61 {
      %c0_37 = arith.constant 0 : index
      %c0_38 = arith.constant 0 : index
      %62 = vector.load %arg10[%c0_37, %c0_38] : memref<1x256xf32, #tpu.memory_space<vmem>>, vector<1x256xf32>
      %63 = vector.shape_cast %62 : vector<1x256xf32> to vector<1x1x256xf32>
      %cst_39 = arith.constant dense<0.000000e+00> : vector<1xf32>
      %64 = vector.multi_reduction <add>, %63, %cst_39 [1, 2] : vector<1x1x256xf32> to vector<1xf32>
      %65 = vector.shape_cast %64 : vector<1xf32> to vector<1x1x1xf32>
      %66 = vector.extract %65[0, 0, 0] : f32 from vector<1x1x1xf32>
      %c0_40 = arith.constant 0 : index
      %c0_41 = arith.constant 0 : index
      %c0_42 = arith.constant 0 : index
      %67 = memref.load %arg9[%c0_40, %c0_41, %c0_42] : memref<1x1x3xf32, #tpu.memory_space<smem>>
      memref.store %66, %arg9[%c0_40, %c0_41, %c0_42] : memref<1x1x3xf32, #tpu.memory_space<smem>>
      %c0_43 = arith.constant 0 : index
      %c0_44 = arith.constant 0 : index
      %68 = vector.load %arg11[%c0_43, %c0_44] : memref<1x256xf32, #tpu.memory_space<vmem>>, vector<1x256xf32>
      %69 = vector.shape_cast %68 : vector<1x256xf32> to vector<1x1x256xf32>
      %cst_45 = arith.constant dense<0.000000e+00> : vector<1xf32>
      %70 = vector.multi_reduction <add>, %69, %cst_45 [1, 2] : vector<1x1x256xf32> to vector<1xf32>
      %71 = vector.shape_cast %70 : vector<1xf32> to vector<1x1x1xf32>
      %72 = vector.extract %71[0, 0, 0] : f32 from vector<1x1x1xf32>
      %c0_46 = arith.constant 0 : index
      %c0_47 = arith.constant 0 : index
      %c1 = arith.constant 1 : index
      %73 = memref.load %arg9[%c0_46, %c0_47, %c1] : memref<1x1x3xf32, #tpu.memory_space<smem>>
      memref.store %72, %arg9[%c0_46, %c0_47, %c1] : memref<1x1x3xf32, #tpu.memory_space<smem>>
      %c0_48 = arith.constant 0 : index
      %c0_49 = arith.constant 0 : index
      %74 = vector.load %arg12[%c0_48, %c0_49] : memref<1x256xf32, #tpu.memory_space<vmem>>, vector<1x256xf32>
      %75 = vector.shape_cast %74 : vector<1x256xf32> to vector<1x1x256xf32>
      %cst_50 = arith.constant dense<0.000000e+00> : vector<1xf32>
      %76 = vector.multi_reduction <add>, %75, %cst_50 [1, 2] : vector<1x1x256xf32> to vector<1xf32>
      %77 = vector.shape_cast %76 : vector<1xf32> to vector<1x1x1xf32>
      %78 = vector.extract %77[0, 0, 0] : f32 from vector<1x1x1xf32>
      %c0_51 = arith.constant 0 : index
      %c0_52 = arith.constant 0 : index
      %c2 = arith.constant 2 : index
      %79 = memref.load %arg9[%c0_51, %c0_52, %c2] : memref<1x1x3xf32, #tpu.memory_space<smem>>
      memref.store %78, %arg9[%c0_51, %c0_52, %c2] : memref<1x1x3xf32, #tpu.memory_space<smem>>
    } else {
    }
    return
  }
  func.func @transform_0(%arg0: i32, %arg1: i32, %arg2: i32) -> (i32, i32, i32) {
    %c1_i32 = arith.constant 1 : i32
    %0 = arith.muli %arg1, %c1_i32 : i32
    %1 = arith.addi %0, %arg2 : i32
    %c0_i32 = arith.constant 0 : i32
    %c0_i32_0 = arith.constant 0 : i32
    return %arg0, %c0_i32, %1 : i32, i32, i32
  }
  func.func @transform_1(%arg0: i32, %arg1: i32, %arg2: i32) -> (i32, i32) {
    %c0_i32 = arith.constant 0 : i32
    %c0_i32_0 = arith.constant 0 : i32
    %c0_i32_1 = arith.constant 0 : i32
    return %c0_i32, %c0_i32_0 : i32, i32
  }
  func.func @transform_2(%arg0: i32, %arg1: i32, %arg2: i32) -> (i32, i32) {
    %c0_i32 = arith.constant 0 : i32
    %c0_i32_0 = arith.constant 0 : i32
    %c0_i32_1 = arith.constant 0 : i32
    return %c0_i32, %c0_i32_0 : i32, i32
  }
  func.func @transform_3(%arg0: i32, %arg1: i32, %arg2: i32) -> (i32, i32) {
    %c0_i32 = arith.constant 0 : i32
    %c0_i32_0 = arith.constant 0 : i32
    %c0_i32_1 = arith.constant 0 : i32
    return %c0_i32, %c0_i32_0 : i32, i32
  }
  func.func @transform_4(%arg0: i32, %arg1: i32, %arg2: i32) -> (i32, i32) {
    %c0_i32 = arith.constant 0 : i32
    %c0_i32_0 = arith.constant 0 : i32
    %c0_i32_1 = arith.constant 0 : i32
    return %c0_i32, %c0_i32_0 : i32, i32
  }
  func.func @transform_5(%arg0: i32, %arg1: i32, %arg2: i32) -> (i32, i32, i32) {
    %c1_i32 = arith.constant 1 : i32
    %0 = arith.muli %arg1, %c1_i32 : i32
    %1 = arith.addi %0, %arg2 : i32
    %c0_i32 = arith.constant 0 : i32
    %c0_i32_0 = arith.constant 0 : i32
    return %arg0, %c0_i32, %1 : i32, i32, i32
  }
  func.func @transform_6(%arg0: i32, %arg1: i32, %arg2: i32) -> (i32, i32, i32) {
    %c0_i32 = arith.constant 0 : i32
    %c0_i32_0 = arith.constant 0 : i32
    return %arg0, %arg1, %c0_i32 : i32, i32, i32
  }
}

</mosaic_0001>

<llo_original>
// kernel: tpu_custom_call.1
$region0: #{tpu_custom_call.1}
  #allocation0 [shape = 'u32[]', space=smem, size = 0x4, offset = 0x4, fixed_abs, tag = 'smem constant byte address 0x4 - core index']
  #allocation1 [shape = 'u32[144,128]{1,0:T(1,128)}', space=vmem, size = 0x12000, scoped, tag = 'internal scratch']
  #allocation2 [shape = 'f32[1,256]{1,0:T(1,128)}', space=vmem, size = 0x400, scoped, tag = 'scratch operand']
  #allocation3 [shape = 'f32[1,256]{1,0:T(1,128)}', space=vmem, size = 0x400, scoped, tag = 'scratch operand']
  #allocation4 [shape = 'f32[1,256]{1,0:T(1,128)}', space=vmem, size = 0x400, scoped, tag = 'scratch operand']
  #allocation5 [shape = 'f32[1,1]{1,0:T(1,128)S(6)}', space=smem, size = 0x200, scoped, tag = 'scoped memory for tpu_custom_call.1']
  %s0 = inlined_call_operand.vmem [shape: f32[2,4,256], index: 0, kind: input, shape index: {}]
  %s1 = inlined_call_operand.vmem [shape: f32[32,4], index: 1, kind: input, shape index: {}]
  %s2 = inlined_call_operand.vmem [shape: f32[32,1], index: 2, kind: input, shape index: {}]
  %s3 = inlined_call_operand.vmem [shape: f32[32,1], index: 3, kind: input, shape index: {}]
  %s4 = inlined_call_operand.<no memory space> [shape: f32[1,1], index: 4, kind: input, shape index: {}]
  %s5 = inlined_call_operand.vmem [shape: f32[2,1,256], index: 5, kind: input, shape index: {}]
  %s6 = inlined_call_operand.hbm [shape: f32[2,1,3], index: 6, kind: output, shape index: {}]
  %s7 = sld [smem:[#allocation0]]
  $region65: #{tpu_custom_call.1} parent=0
    _
  %s9 = ssub.s32 1, %s7
  %s10 = scalar_select 0, %s9, %s7
  %11 = sst [smem:[#allocation5]] %s4
  $region1: #{tpu_custom_call.1} parent=0
    #allocation6 [shape = 'u8[1024]{0}', space=smem, size = 0x400, scoped, tag = 'output window, operand 0']
    #allocation7 [shape = 's32[2]{0}', space=sflag, size = 0x8, scoped, tag = 'scoped memory for tpu_custom_call.1']
    %12 = vsyncpa [#allocation7], 0
    %s13 = scalar_lea.sflag [#allocation7], 1
    %14 = vsyncpa %s13, 0
    loop: start=0, step=1, limit=4
    $region2: #{tpu_custom_call.1} parent=1 // loop_pre_header
      _
    $region3: #{tpu_custom_call.1} parent=1 // loop_header
      %s16 = sphi 0, %s20
      %p17 = scmp.ge.s32.totalorder %s16, 4
      %s23 = sphi 0, %s42
      %s24 = sphi 0, %s38
      %s25 = sphi 0, %s34
      %s26 = sphi 0, %s23
      %s27 = sphi 0, %s24
      %s28 = sphi 0, %s25
      %s29 = sphi 0, %s26
      %s30 = sphi 0, %s27
      %s31 = sphi 0, %s28
      %s49 = sphi 0, %s51
      %s52 = sphi 0, %s49
      %s53 = sphi 0, %s52
      %s69 = sphi 0, %s53
      %s73 = sphi 0, %s73
      %s75 = sphi 0, %s73
      %s76 = sphi 0, %s75
      %s90 = sphi 0, %s76
      %s94 = sphi 0, %s94
      %s96 = sphi 0, %s94
      %s97 = sphi 0, %s96
      %s111 = sphi 0, %s97
      %s115 = sphi 0, %s115
      %s117 = sphi 0, %s115
      %s118 = sphi 0, %s117
      %s132 = sphi 0, %s118
      %s136 = sphi 0, %s136
      %s138 = sphi 0, %s136
      %s139 = sphi 0, %s138
      %s153 = sphi 0, %s139
      %s163 = sphi 0, %s165
      %s166 = sphi 0, %s163
      %s167 = sphi 0, %s166
      %s183 = sphi 0, %s167
      %s191 = sphi 0, %s193
      %s194 = sphi 0, %s191
      %s195 = sphi 0, %s194
      %s211 = sphi 0, %s195
    $region4: #{tpu_custom_call.1} parent=1 // loop_header_branch
      %19 = sbr.rel (%p17) target = $region8
    $region5: #{tpu_custom_call.1} parent=1 // loop_body
      %s21 = ssub.s32 %s16, 1
      %s22 = ssub.s32 %s16, 2
      %s32 = sadd.s32 1, %s25
      %p33 = scmp.ge.s32.totalorder %s32, 1
      %s34 = scalar_select %p33, 0, %s32
      %s35 = sadd.s32 1, %s24
      %s36 = scalar_select %p33, %s35, %s24
      %p37 = scmp.ge.s32.totalorder %s36, 1
      %s38 = scalar_select %p37, 0, %s36
      %s39 = sadd.s32 1, %s23
      %s40 = scalar_select %p37, %s39, %s23
      %p41 = scmp.ge.s32.totalorder %s40, 2
      %s42 = scalar_select %p41, 0, %s40
      %s43 = sadd.s32 %s24, %s25
      %s44 = sadd.s32 %s38, %s34
      %s45 = ssub.s32 %s23, %s42
      %s46 = ssub.s32 %s43, %s44
      %s47 = sor.u32 %s45, %s46
      %p48 = scmp.eq.s32.totalorder %s47, 0
      %s50 = sadd.s32 %s49, 1
      %s51 = scalar_select %p48, %s49, %s50
      %p54 = pneg %p48
      %p55 = scmp.eq.s32.totalorder %s16, 1
      %p56 = por %p54, %p55
      %p57 = scmp.ne.s32.totalorder %s49, %s52
      %p58 = scmp.eq.s32.totalorder %s16, 0
      %p59 = por %p57, %p58
      %p60 = scmp.ne.s32.totalorder %s49, %s52
      %p61 = scmp.eq.s32.totalorder %s21, 1
      %p62 = por %p60, %p61
      %p63 = scmp.ne.s32.totalorder %s52, %s53
      %p64 = scmp.eq.s32.totalorder %s21, 0
      %p65 = por %p63, %p64
      %p66 = scmp.ne.s32.totalorder %s52, %s53
      %p67 = scmp.eq.s32.totalorder %s22, 1
      %p68 = por %p66, %p67
      %p70 = scmp.ne.s32.totalorder %s53, %s69
      %p71 = scmp.eq.s32.totalorder %s22, 0
      %p72 = por %p70, %p71
      %s74 = sadd.s32 %s73, 1
      %p77 = scmp.eq.s32.totalorder %s16, 1
      %p78 = scmp.ne.s32.totalorder %s73, %s75
      %p79 = scmp.eq.s32.totalorder %s16, 0
      %p80 = por %p78, %p79
      %p81 = scmp.ne.s32.totalorder %s73, %s75
      %p82 = scmp.eq.s32.totalorder %s21, 1
      %p83 = por %p81, %p82
      %p84 = scmp.ne.s32.totalorder %s75, %s76
      %p85 = scmp.eq.s32.totalorder %s21, 0
      %p86 = por %p84, %p85
      %p87 = scmp.ne.s32.totalorder %s75, %s76
      %p88 = scmp.eq.s32.totalorder %s22, 1
      %p89 = por %p87, %p88
      %p91 = scmp.ne.s32.totalorder %s76, %s90
      %p92 = scmp.eq.s32.totalorder %s22, 0
      %p93 = por %p91, %p92
      %s95 = sadd.s32 %s94, 1
      %p98 = scmp.eq.s32.totalorder %s16, 1
      %p99 = scmp.ne.s32.totalorder %s94, %s96
      %p100 = scmp.eq.s32.totalorder %s16, 0
      %p101 = por %p99, %p100
      %p102 = scmp.ne.s32.totalorder %s94, %s96
      %p103 = scmp.eq.s32.totalorder %s21, 1
      %p104 = por %p102, %p103
      %p105 = scmp.ne.s32.totalorder %s96, %s97
      %p106 = scmp.eq.s32.totalorder %s21, 0
      %p107 = por %p105, %p106
      %p108 = scmp.ne.s32.totalorder %s96, %s97
      %p109 = scmp.eq.s32.totalorder %s22, 1
      %p110 = por %p108, %p109
      %p112 = scmp.ne.s32.totalorder %s97, %s111
      %p113 = scmp.eq.s32.totalorder %s22, 0
      %p114 = por %p112, %p113
      %s116 = sadd.s32 %s115, 1
      %p119 = scmp.eq.s32.totalorder %s16, 1
      %p120 = scmp.ne.s32.totalorder %s115, %s117
      %p121 = scmp.eq.s32.totalorder %s16, 0
      %p122 = por %p120, %p121
      %p123 = scmp.ne.s32.totalorder %s115, %s117
      %p124 = scmp.eq.s32.totalorder %s21, 1
      %p125 = por %p123, %p124
      %p126 = scmp.ne.s32.totalorder %s117, %s118
      %p127 = scmp.eq.s32.totalorder %s21, 0
      %p128 = por %p126, %p127
      %p129 = scmp.ne.s32.totalorder %s117, %s118
      %p130 = scmp.eq.s32.totalorder %s22, 1
      %p131 = por %p129, %p130
      %p133 = scmp.ne.s32.totalorder %s118, %s132
      %p134 = scmp.eq.s32.totalorder %s22, 0
      %p135 = por %p133, %p134
      %s137 = sadd.s32 %s136, 1
      %p140 = scmp.eq.s32.totalorder %s16, 1
      %p141 = scmp.ne.s32.totalorder %s136, %s138
      %p142 = scmp.eq.s32.totalorder %s16, 0
      %p143 = por %p141, %p142
      %p144 = scmp.ne.s32.totalorder %s136, %s138
      %p145 = scmp.eq.s32.totalorder %s21, 1
      %p146 = por %p144, %p145
      %p147 = scmp.ne.s32.totalorder %s138, %s139
      %p148 = scmp.eq.s32.totalorder %s21, 0
      %p149 = por %p147, %p148
      %p150 = scmp.ne.s32.totalorder %s138, %s139
      %p151 = scmp.eq.s32.totalorder %s22, 1
      %p152 = por %p150, %p151
      %p154 = scmp.ne.s32.totalorder %s139, %s153
      %p155 = scmp.eq.s32.totalorder %s22, 0
      %p156 = por %p154, %p155
      %s157 = sadd.s32 %s24, %s25
      %s158 = sadd.s32 %s38, %s34
      %s159 = ssub.s32 %s23, %s42
      %s160 = ssub.s32 %s157, %s158
      %s161 = sor.u32 %s159, %s160
      %p162 = scmp.eq.s32.totalorder %s161, 0
      %s164 = sadd.s32 %s163, 1
      %s165 = scalar_select %p162, %s163, %s164
      %p168 = pneg %p162
      %p169 = scmp.eq.s32.totalorder %s16, 1
      %p170 = por %p168, %p169
      %p171 = scmp.ne.s32.totalorder %s163, %s166
      %p172 = scmp.eq.s32.totalorder %s16, 0
      %p173 = por %p171, %p172
      %p174 = scmp.ne.s32.totalorder %s163, %s166
      %p175 = scmp.eq.s32.totalorder %s21, 1
      %p176 = por %p174, %p175
      %p177 = scmp.ne.s32.totalorder %s166, %s167
      %p178 = scmp.eq.s32.totalorder %s21, 0
      %p179 = por %p177, %p178
      %p180 = scmp.ne.s32.totalorder %s166, %s167
      %p181 = scmp.eq.s32.totalorder %s22, 1
      %p182 = por %p180, %p181
      %p184 = scmp.ne.s32.totalorder %s167, %s183
      %p185 = scmp.eq.s32.totalorder %s22, 0
      %p186 = por %p184, %p185
      %s187 = ssub.s32 %s23, %s42
      %s188 = ssub.s32 %s24, %s38
      %s189 = sor.u32 %s187, %s188
      %p190 = scmp.eq.s32.totalorder %s189, 0
      %s192 = sadd.s32 %s191, 1
      %s193 = scalar_select %p190, %s191, %s192
      %p196 = pneg %p190
      %p197 = scmp.eq.s32.totalorder %s16, 1
      %p198 = por %p196, %p197
      %p199 = scmp.ne.s32.totalorder %s191, %s194
      %p200 = scmp.eq.s32.totalorder %s16, 0
      %p201 = por %p199, %p200
      %p202 = scmp.ne.s32.totalorder %s191, %s194
      %p203 = scmp.eq.s32.totalorder %s21, 1
      %p204 = por %p202, %p203
      %p205 = scmp.ne.s32.totalorder %s194, %s195
      %p206 = scmp.eq.s32.totalorder %s21, 0
      %p207 = por %p205, %p206
      %p208 = scmp.ne.s32.totalorder %s194, %s195
      %p209 = scmp.eq.s32.totalorder %s22, 1
      %p210 = por %p208, %p209
      %p212 = scmp.ne.s32.totalorder %s195, %s211
      %p213 = scmp.eq.s32.totalorder %s22, 0
      %p214 = por %p212, %p213
      %p215 = scmp.le.s32.totalorder 1, %s16
      %p216 = scmp.lt.s32.totalorder %s16, 3
      %p217 = pnand %p215, %p216
      %p218 = pneg %p217
      // Predicated region
      $region9: #{tpu_custom_call.1} parent=5 // pred_check
        _
      $region10: #{tpu_custom_call.1} parent=5 // pred_check_branch
        %220 = sbr.rel (%p217) target = $region12
      $region11: #{tpu_custom_call.1} parent=5 // pred_region
        %s221 = ssub.s32 %s16, 1
        // Predicated region
        $region13: #{tpu_custom_call.1} parent=11 // pred_check
          %p222 = pneg %p86
        $region14: #{tpu_custom_call.1} parent=11 // pred_check_branch
          %224 = sbr.rel (%p222) target = $region16
        $region15: #{tpu_custom_call.1} parent=11 // pred_region
          _
        $region16: #{tpu_custom_call.1} parent=11 // pred_fallthru
          _
        // Predicated region
        $region17: #{tpu_custom_call.1} parent=11 // pred_check
          %p225 = pneg %p107
        $region18: #{tpu_custom_call.1} parent=11 // pred_check_branch
          %227 = sbr.rel (%p225) target = $region20
        $region19: #{tpu_custom_call.1} parent=11 // pred_region
          _
        $region20: #{tpu_custom_call.1} parent=11 // pred_fallthru
          _
        // Predicated region
        $region21: #{tpu_custom_call.1} parent=11 // pred_check
          %p228 = pneg %p128
        $region22: #{tpu_custom_call.1} parent=11 // pred_check_branch
          %230 = sbr.rel (%p228) target = $region24
        $region23: #{tpu_custom_call.1} parent=11 // pred_region
          _
        $region24: #{tpu_custom_call.1} parent=11 // pred_fallthru
          _
        // Predicated region
        $region25: #{tpu_custom_call.1} parent=11 // pred_check
          %p231 = pneg %p149
        $region26: #{tpu_custom_call.1} parent=11 // pred_check_branch
          %233 = sbr.rel (%p231) target = $region28
        $region27: #{tpu_custom_call.1} parent=11 // pred_region
          _
        $region28: #{tpu_custom_call.1} parent=11 // pred_fallthru
          _
      $region12: #{tpu_custom_call.1} parent=5 // pred_fallthru
        _
      %p234 = scmp.lt.s32.totalorder %s16, 2
      // Predicated region
      $region29: #{tpu_custom_call.1} parent=5 // pred_check
        %p235 = pneg %p234
      $region30: #{tpu_custom_call.1} parent=5 // pred_check_branch
        %237 = sbr.rel (%p235) target = $region32
      $region31: #{tpu_custom_call.1} parent=5 // pred_region
        // Predicated region
        $region33: #{tpu_custom_call.1} parent=31 // pred_check
          %p238 = pneg %p59
        $region34: #{tpu_custom_call.1} parent=31 // pred_check_branch
          %240 = sbr.rel (%p238) target = $region36
        $region35: #{tpu_custom_call.1} parent=31 // pred_region
          %s241 = sadd.s32 %s24, %s25
          %s242 = smul.u32 2, %s241
          %p243 = scmp.lt.s32.totalorder %s23, 1
          %s244 = scalar_select %p243, %s23, 1
          %p245 = scmp.lt.s32.totalorder %s242, 1
          %s246 = scalar_select %p245, %s242, 1
          %s247 = smul.addr %s244, 2
          %s248 = sadd.s32 %s246, %s247
          %s249 = smul.addr %s248, 4
          %s250 = scalar_lea.vmem %s0, %s249
          %s251 = sadd.s32 %s24, %s25
          %s252 = smul.u32 2, %s251
        $region36: #{tpu_custom_call.1} parent=31 // pred_fallthru
          _
        // Predicated region
        $region37: #{tpu_custom_call.1} parent=31 // pred_check
          %p253 = pneg %p173
        $region38: #{tpu_custom_call.1} parent=31 // pred_check_branch
          %255 = sbr.rel (%p253) target = $region40
        $region39: #{tpu_custom_call.1} parent=31 // pred_region
          %s256 = sadd.s32 %s24, %s25
          %s257 = smul.u32 2, %s256
          %p258 = scmp.lt.s32.totalorder %s23, 1
          %s259 = scalar_select %p258, %s23, 1
          %p260 = scmp.lt.s32.totalorder %s257, 1
          %s261 = scalar_select %p260, %s257, 1
          %s262 = smul.addr %s259, 2
          %s263 = sadd.s32 %s261, %s262
          %s264 = scalar_lea.vmem %s5, %s263
          %s265 = sadd.s32 %s24, %s25
          %s266 = smul.u32 2, %s265
        $region40: #{tpu_custom_call.1} parent=31 // pred_fallthru
          _
      $region32: #{tpu_custom_call.1} parent=5 // pred_fallthru
        _
      %p267 = scmp.le.s32.totalorder 1, %s16
      %p268 = scmp.lt.s32.totalorder %s16, 3
      %p269 = pnand %p267, %p268
      %p270 = pneg %p269
      // Predicated region
      $region41: #{tpu_custom_call.1} parent=5 // pred_check
        _
      $region42: #{tpu_custom_call.1} parent=5 // pred_check_branch
        %272 = sbr.rel (%p269) target = $region44
      $region43: #{tpu_custom_call.1} parent=5 // pred_region
        %s273 = ssub.s32 %s16, 1
        %s274 = sadd.s32 %s27, %s28
        %s275 = smul.u32 2, %s274
        %p276 = scmp.lt.s32.totalorder %s26, 1
        %s277 = scalar_select %p276, %s26, 1
        %p278 = scmp.lt.s32.totalorder %s275, 1
        %s279 = scalar_select %p278, %s275, 1
        %s280 = smul.addr %s277, 2
        %s281 = sadd.s32 %s279, %s280
        %s282 = smul.addr %s281, 4
        %s283 = scalar_lea.vmem %s0, %s282
        %p284 = pneg %p65
        %p285 = pneg %p62
        %p286 = pneg %p86
        %p287 = pneg %p83
        %p288 = pneg %p107
        %p289 = pneg %p104
        %p290 = pneg %p128
        %p291 = pneg %p125
        %p292 = pneg %p149
        %p293 = pneg %p146
        %s294 = sadd.s32 %s27, %s28
        %s295 = smul.u32 2, %s294
        %p296 = scmp.lt.s32.totalorder %s26, 1
        %s297 = scalar_select %p296, %s26, 1
        %p298 = scmp.lt.s32.totalorder %s295, 1
        %s299 = scalar_select %p298, %s295, 1
        %s300 = smul.addr %s297, 2
        %s301 = sadd.s32 %s299, %s300
        %s302 = scalar_lea.vmem %s5, %s301
        %p303 = pneg %p179
        %p304 = pneg %p176
        %p305 = pneg %p207
        %p306 = pneg %p204
        %s307 = sand.u32 %s194, 1
        %s308 = scalar_lea.sflag [#allocation7], %s307
        %s309 = sand.u32 %s194, 1
        %s310 = smul.addr %s309, 128
        %s311 = scalar_lea.smem [#allocation6], %s310
        %s312 = sadd.s32 %s27, %s28
        %s313 = smul.u32 2, %s312
        %p314 = scmp.lt.s32.totalorder %s26, 1
        %s315 = scalar_select %p314, %s26, 1
        %p316 = scmp.lt.s32.totalorder %s313, 1
        %s317 = scalar_select %p316, %s313, 1
        %s318 = smul.addr %s315, 2
        %s319 = sadd.s32 %s317, %s318
        %s320 = smul.addr %s319, 4
        %s321 = scalar_lea.vmem %s0, %s320
        %s322 = sadd.s32 %s27, %s28
        %s323 = smul.u32 2, %s322
        %s324 = sadd.s32 %s27, %s28
        %s325 = smul.u32 2, %s324
        %p326 = scmp.lt.s32.totalorder %s26, 1
        %s327 = scalar_select %p326, %s26, 1
        %p328 = scmp.lt.s32.totalorder %s325, 1
        %s329 = scalar_select %p328, %s325, 1
        %s330 = smul.addr %s327, 2
        %s331 = sadd.s32 %s329, %s330
        %s332 = scalar_lea.vmem %s5, %s331
        %s333 = sadd.s32 %s27, %s28
        %s334 = smul.u32 2, %s333
        %p335 = scmp.eq.s32.totalorder %s28, 0
        // Predicated region
        $region45: #{tpu_custom_call.1} parent=43 // pred_check
          %p336 = pneg %p335
        $region46: #{tpu_custom_call.1} parent=43 // pred_check_branch
          %338 = sbr.rel (%p336) target = $region48
        $region47: #{tpu_custom_call.1} parent=43 // pred_region
          %v339 = vlaneseq
          %vm340 = vcmp.ge.s32.totalorder %v339, 0
          %vm341 = vcmp.lt.s32.totalorder %v339, 256
          %vm342 = vmand %vm340, %vm341
          %343 = vst.msk [vmem:[#allocation2] sm:$0x3] %vm342, 0.0
          %344 = vst.msk [vmem:[#allocation3] sm:$0x3] %vm342, 0.0
          %345 = vst.msk [vmem:[#allocation4] sm:$0x3] %vm342, 0.0
        $region48: #{tpu_custom_call.1} parent=43 // pred_fallthru
          _
        %v346 = vld [vmem:[%s321] sm:$0xff]
        %v347 = vld [vmem:[%s332] sm:$0x3]
        %v348 = vld [vmem:[%s1] sm:$0xff]
        %v349 = vld [vmem:[%s1 + $0x8] sm:$0xff]
        %v350 = vld [vmem:[%s1 + $0x10] sm:$0xff]
        %v351 = vld [vmem:[%s1 + $0x18] sm:$0xff]
        %v352 = vld [vmem:[%s2] sm:$0xff]
        %v353 = vld [vmem:[%s2 + $0x8] sm:$0xff]
        %v354 = vld [vmem:[%s2 + $0x10] sm:$0xff]
        %v355 = vld [vmem:[%s2 + $0x18] sm:$0xff]
        %357 = vset.pattern.permute.xlu0 0
        %358 = vperm.xlu0 %357, %v352
        %v359 = vpop.permute.xlu0 %358
        %362 = vset.pattern.permute.xlu0 0
        %363 = vperm.xlu0 %362, %v353
        %v364 = vpop.permute.xlu0 %363
        %367 = vset.pattern.permute.xlu0 0
        %368 = vperm.xlu0 %367, %v354
        %v369 = vpop.permute.xlu0 %368
        %372 = vset.pattern.permute.xlu0 0
        %373 = vperm.xlu0 %372, %v355
        %v374 = vpop.permute.xlu0 %373
        %v377 = vcombine.high %v346, %v346
        %vm378 = vcmask 31744
        %v380 = vsel %vm378, %v348, 0
        %v383 = vsel %vm378, %v349, 0
        %v386 = vsel %vm378, %v350, 0
        %v389 = vsel %vm378, %v351, 0
        %vm391 = vcmask 1043456
        %v392 = vsel %vm391, %v346, 0
        %v394 = vsel %vm391, %v377, 0
        %396 = vmatprep.subr.mxu0 %v394
        %397 = vmatpush1.msra.mxu0 %v392
        %398 = vmatprep.subr.mxu0 0.0
        %399 = vmatpush1.msra.mxu0 0.0
        %400 = vmatprep.subr.mxu0 0.0
        %401 = vmatpush1.msra.mxu0 0.0
        %402 = vmatprep.subr.mxu0 0.0
        %403 = vmatpush1.msra.mxu0 0.0
        %404 = vmatprep.subr.mxu0 0.0
        %405 = vmatpush1.msra.mxu0 0.0
        %406 = vmatprep.subr.mxu0 0.0
        %407 = vmatpush1.msra.mxu0 0.0
        %408 = vmatprep.subr.mxu0 0.0
        %409 = vmatpush1.msra.mxu0 0.0
        %410 = vmatprep.subr.mxu0 0.0
        %411 = vmatpush1.msra.mxu0 0.0
        %412 = vmatprep.subr.mxu0 0.0
        %413 = vmatpush1.msra.mxu0 0.0
        %414 = vmatprep.subr.mxu0 0.0
        %415 = vmatpush1.msra.mxu0 0.0
        %416 = vmatprep.subr.mxu0 0.0
        %417 = vmatpush1.msra.mxu0 0.0
        %418 = vmatprep.subr.mxu0 0.0
        %419 = vmatpush1.msra.mxu0 0.0
        %420 = vmatprep.subr.mxu0 0.0
        %421 = vmatpush1.msra.mxu0 0.0
        %422 = vmatprep.subr.mxu0 0.0
        %423 = vmatpush1.msra.mxu0 0.0
        %424 = vmatprep.subr.mxu0 0.0
        %425 = vmatpush1.msra.mxu0 0.0
        %426 = vmatprep.subr.mxu0 0.0
        %427 = vmatpush1.msra.mxu0 0.0
        %428 = vmatprep.subr.mxu0 0.0
        %429 = vmatpush1.msra.mxu0 0.0
        %430 = vmatprep.subr.mxu0 0.0
        %431 = vmatpush1.msra.mxu0 0.0
        %432 = vmatprep.subr.mxu0 0.0
        %433 = vmatpush1.msra.mxu0 0.0
        %434 = vmatprep.subr.mxu0 0.0
        %435 = vmatpush1.msra.mxu0 0.0
        %436 = vmatprep.subr.mxu0 0.0
        %437 = vmatpush1.msra.mxu0 0.0
        %438 = vmatprep.subr.mxu0 0.0
        %439 = vmatpush1.msra.mxu0 0.0
        %440 = vmatprep.subr.mxu0 0.0
        %441 = vmatpush1.msra.mxu0 0.0
        %442 = vmatprep.subr.mxu0 0.0
        %443 = vmatpush1.msra.mxu0 0.0
        %444 = vmatprep.subr.mxu0 0.0
        %445 = vmatpush1.msra.mxu0 0.0
        %446 = vmatprep.subr.mxu0 0.0
        %447 = vmatpush1.msra.mxu0 0.0
        %448 = vmatprep.subr.mxu0 0.0
        %449 = vmatpush1.msra.mxu0 0.0
        %450 = vmatprep.subr.mxu0 0.0
        %451 = vmatpush1.msra.mxu0 0.0
        %452 = vmatprep.subr.mxu0 0.0
        %453 = vmatpush1.msra.mxu0 0.0
        %454 = vmatprep.subr.mxu0 0.0
        %455 = vmatpush1.msra.mxu0 0.0
        %456 = vmatprep.subr.mxu0 0.0
        %457 = vmatpush1.msra.mxu0 0.0
        %458 = vmatprep.subr.mxu0 0.0
        %459 = vmatpush1.msra.mxu0 0.0
        %460 = vmatprep.mubr.f32.mxu0 0.0
        %461 = vmatmul.mubr.f32.gmra.mrb[0].mxu0 %v380
        %v462 = vpop.f32.mrb[0].mxu0
        %v463 = vadd.f32 %v359, %v462
        %v464 = vpop.f32.mrb[0].mxu0
        %v465 = vadd.f32 %v359, %v464
        %466 = vmatprep.mubr.f32.mxu0 0.0
        %467 = vmatmul.mubr.f32.gmra.mrb[0].mxu0 %v383
        %v468 = vpop.f32.mrb[0].mxu0
        %v469 = vadd.f32 %v364, %v468
        %v470 = vpop.f32.mrb[0].mxu0
        %v471 = vadd.f32 %v364, %v470
        %472 = vmatprep.mubr.f32.mxu0 0.0
        %473 = vmatmul.mubr.f32.gmra.mrb[0].mxu0 %v386
        %v474 = vpop.f32.mrb[0].mxu0
        %v475 = vadd.f32 %v369, %v474
        %v476 = vpop.f32.mrb[0].mxu0
        %v477 = vadd.f32 %v369, %v476
        %478 = vmatprep.mubr.f32.mxu0 0.0
        %479 = vmatmul.mubr.f32.gmra.mrb[0].mxu0 %v389
        %v480 = vpop.f32.mrb[0].mxu0
        %v481 = vadd.f32 %v374, %v480
        %v482 = vpop.f32.mrb[0].mxu0
        %v483 = vadd.f32 %v374, %v482
        %484 = vdwg.mxu0
        %v485 = vmul.f32 %v463, 0.044715
        %v486 = vmul.f32 %v465, 0.044715
        %v487 = vmul.f32 %v469, 0.044715
        %v488 = vmul.f32 %v471, 0.044715
        %v489 = vmul.f32 %v475, 0.044715
        %v490 = vmul.f32 %v477, 0.044715
        %v491 = vmul.f32 %v481, 0.044715
        %v492 = vmul.f32 %v483, 0.044715
        %v493 = vmul.f32 %v485, %v463
        %v494 = vmul.f32 %v486, %v465
        %v495 = vmul.f32 %v487, %v469
        %v496 = vmul.f32 %v488, %v471
        %v497 = vmul.f32 %v489, %v475
        %v498 = vmul.f32 %v490, %v477
        %v499 = vmul.f32 %v491, %v481
        %v500 = vmul.f32 %v492, %v483
        %v501 = vmul.f32 %v493, %v463
        %v502 = vmul.f32 %v494, %v465
        %v503 = vmul.f32 %v495, %v469
        %v504 = vmul.f32 %v496, %v471
        %v505 = vmul.f32 %v497, %v475
        %v506 = vmul.f32 %v498, %v477
        %v507 = vmul.f32 %v499, %v481
        %v508 = vmul.f32 %v500, %v483
        %v509 = vadd.f32 %v463, %v501
        %v510 = vadd.f32 %v465, %v502
        %v511 = vadd.f32 %v469, %v503
        %v512 = vadd.f32 %v471, %v504
        %v513 = vadd.f32 %v475, %v505
        %v514 = vadd.f32 %v477, %v506
        %v515 = vadd.f32 %v481, %v507
        %v516 = vadd.f32 %v483, %v508
        %v517 = vmul.f32 %v509, 0.7978846
        %v518 = vmul.f32 %v510, 0.7978846
        %v519 = vmul.f32 %v511, 0.7978846
        %v520 = vmul.f32 %v512, 0.7978846
        %v521 = vmul.f32 %v513, 0.7978846
        %v522 = vmul.f32 %v514, 0.7978846
        %v523 = vmul.f32 %v515, 0.7978846
        %v524 = vmul.f32 %v516, 0.7978846
        %v525 = vtanh.pop %v517
        %v526 = vtanh.pop %v518
        %v527 = vtanh.pop %v519
        %v528 = vtanh.pop %v520
        %v529 = vtanh.pop %v521
        %v530 = vtanh.pop %v522
        %v531 = vtanh.pop %v523
        %v532 = vtanh.pop %v524
        %v533 = vld [vmem:[%s3] sm:$0xff]
        %v534 = vld [vmem:[%s3 + $0x8] sm:$0xff]
        %v535 = vld [vmem:[%s3 + $0x10] sm:$0xff]
        %v536 = vld [vmem:[%s3 + $0x18] sm:$0xff]
        %538 = vset.pattern.permute.xlu0 0
        %539 = vperm.xlu0 %538, %v533
        %v540 = vpop.permute.xlu0 %539
        %543 = vset.pattern.permute.xlu0 0
        %544 = vperm.xlu0 %543, %v534
        %v545 = vpop.permute.xlu0 %544
        %548 = vset.pattern.permute.xlu0 0
        %549 = vperm.xlu0 %548, %v535
        %v550 = vpop.permute.xlu0 %549
        %553 = vset.pattern.permute.xlu0 0
        %554 = vperm.xlu0 %553, %v536
        %v555 = vpop.permute.xlu0 %554
        %v557 = vmul.f32 %v540, %v463
        %v558 = vmul.f32 %v540, %v465
        %v559 = vmul.f32 %v545, %v469
        %v560 = vmul.f32 %v545, %v471
        %v561 = vmul.f32 %v550, %v475
        %v562 = vmul.f32 %v550, %v477
        %v563 = vmul.f32 %v555, %v481
        %v564 = vmul.f32 %v555, %v483
        %v565 = vadd.f32 %v525, 1.0
        %v566 = vadd.f32 %v526, 1.0
        %v567 = vadd.f32 %v527, 1.0
        %v568 = vadd.f32 %v528, 1.0
        %v569 = vadd.f32 %v529, 1.0
        %v570 = vadd.f32 %v530, 1.0
        %v571 = vadd.f32 %v531, 1.0
        %v572 = vadd.f32 %v532, 1.0
        %v573 = vmul.f32 %v557, %v565
        %v574 = vmul.f32 %v558, %v566
        %v575 = vmul.f32 %v559, %v567
        %v576 = vmul.f32 %v560, %v568
        %v577 = vmul.f32 %v561, %v569
        %v578 = vmul.f32 %v562, %v570
        %v579 = vmul.f32 %v563, %v571
        %v580 = vmul.f32 %v564, %v572
        %v581 = vadd.f32 %v573, %v575
        %v582 = vadd.f32 %v581, %v577
        %v583 = vadd.f32 %v582, %v579
        %v584 = vrot.slane %v583, 4
        %v585 = vadd.f32 %v583, %v584
        %v586 = vrot.slane %v585, 2
        %v587 = vadd.f32 %v585, %v586
        %v588 = vrot.slane %v587, 1
        %v589 = vadd.f32 %v587, %v588
        %v590 = vadd.f32 %v574, %v576
        %v591 = vadd.f32 %v590, %v578
        %v592 = vadd.f32 %v591, %v580
        %v593 = vrot.slane %v592, 4
        %v594 = vadd.f32 %v592, %v593
        %v595 = vrot.slane %v594, 2
        %v596 = vadd.f32 %v594, %v595
        %v597 = vrot.slane %v596, 1
        %v598 = vadd.f32 %v596, %v597
        %s599 = sld [smem:[#allocation5]]
        %v600 = vstv %s599
        %v601 = vadd.f32 %v589, %v600
        %v602 = vadd.f32 %v598, %v600
        %v603 = vand.u32 2147483647, %v601
        %v604 = vand.u32 2147483647, %v602
        %v605 = vsub.f32 0.0, %v603
        %v606 = vsub.f32 0.0, %v604
        %v607 = vmul.f32 %v605, 1.442695
        %v608 = vpow.pop %v607
        %v609 = vmul.f32 %v606, 1.442695
        %v610 = vpow.pop %v609
        %v611 = vmax.f32 %v601, 0.0
        %v612 = vmax.f32 %v602, 0.0
        %v614 = vlaneseq
        %v615 = vshrl.u32 %v614, 7
        %v616 = vsub.s32 0, %v615
        %v617 = vrot.slane %v347, %v616
        %v618 = vlaneseq
        %v619 = vshrl.u32 %v618, 7
        %v620 = vsub.s32 1, %v619
        %v621 = vrot.slane %v347, %v620
        %v624 = vmul.f32 %v601, %v617
        %v625 = vmul.f32 %v602, %v621
        %v626 = vsub.f32 %v611, %v624
        %v627 = vsub.f32 %v612, %v625
        %v628 = vadd.f32 %v608, 1.0
        %v629 = vlog2.pop %v628
        %v630 = vmul.f32 %v629, 0.6931472
        %v631 = vmul.f32 -0.5, %v608
        %v632 = vadd.f32 %v631, 1.0
        %v633 = vmul.f32 %v632, %v608
        %v634 = vand.u32 2147483647, %v608
        %vm635 = vcmp.lt.f32.partialorder %v634, 0.0004427343
        %v636 = vsel %vm635, %v633, %v630
        %v637 = vadd.f32 %v610, 1.0
        %v638 = vlog2.pop %v637
        %v639 = vmul.f32 %v638, 0.6931472
        %v640 = vmul.f32 -0.5, %v610
        %v641 = vadd.f32 %v640, 1.0
        %v642 = vmul.f32 %v641, %v610
        %v643 = vand.u32 2147483647, %v610
        %vm644 = vcmp.lt.f32.partialorder %v643, 0.0004427343
        %v645 = vsel %vm644, %v642, %v639
        %v646 = vadd.f32 %v626, %v636
        %v647 = vadd.f32 %v627, %v645
        %v648 = vadd.f32 %v608, 1.0
        %v649 = vadd.f32 %v610, 1.0
        %v650 = vrcp.pop %v648
        %v651 = vrcp.pop %v649
        %vm652 = vcmp.ge.f32.partialorder %v601, 0.0
        %vm653 = vcmp.ge.f32.partialorder %v602, 0.0
        %v654 = vsel %vm652, 1.0, %v608
        %v655 = vsel %vm653, 1.0, %v610
        %v656 = vmul.f32 %v654, %v650
        %v657 = vmul.f32 %v655, %v651
        %v658 = vld [vmem:[#allocation2] sm:$0x3]
        %v661 = vcombine.low %v646, %v647
        %v663 = vunpack.c.l.s4 1966171168
        %v664 = vunpack.c.0.s8 %v663
        %v665 = vlaneseq
        %v666 = vshrl.u32 %v665, 7
        %v667 = vsub.s32 %v664, %v666
        %v668 = vrot.slane %v661, %v667
        %v670 = vunpack.c.l.s4 1966171168
        %v671 = vunpack.c.0.s8 %v670
        %v672 = vlaneseq
        %v673 = vshrl.u32 %v672, 7
        %v674 = vsub.s32 %v671, %v673
        %v675 = vrot.slane %v668, %v674
        %v677 = vadd.f32 %v658, %v675
        %v678 = vlaneseq
        %vm679 = vcmp.ge.s32.totalorder %v678, 0
        %vm680 = vcmp.lt.s32.totalorder %v678, 256
        %vm681 = vmand %vm679, %vm680
        %682 = vst.msk [vmem:[#allocation2] sm:$0x3] %vm681, %v677
        %v683 = vld [vmem:[#allocation3] sm:$0x3]
        %v684 = vmul.f32 %v656, %v617
        %v685 = vmul.f32 %v657, %v621
        %v688 = vcombine.low %v684, %v685
        %v690 = vunpack.c.l.s4 1966171168
        %v691 = vunpack.c.0.s8 %v690
        %v692 = vlaneseq
        %v693 = vshrl.u32 %v692, 7
        %v694 = vsub.s32 %v691, %v693
        %v695 = vrot.slane %v688, %v694
        %v697 = vunpack.c.l.s4 1966171168
        %v698 = vunpack.c.0.s8 %v697
        %v699 = vlaneseq
        %v700 = vshrl.u32 %v699, 7
        %v701 = vsub.s32 %v698, %v700
        %v702 = vrot.slane %v695, %v701
        %v704 = vadd.f32 %v683, %v702
        %705 = vst.msk [vmem:[#allocation3] sm:$0x3] %vm681, %v704
        %v706 = vld [vmem:[#allocation4] sm:$0x3]
        %v709 = vcombine.low %v656, %v657
        %v711 = vunpack.c.l.s4 1966171168
        %v712 = vunpack.c.0.s8 %v711
        %v713 = vlaneseq
        %v714 = vshrl.u32 %v713, 7
        %v715 = vsub.s32 %v712, %v714
        %v716 = vrot.slane %v709, %v715
        %v718 = vunpack.c.l.s4 1966171168
        %v719 = vunpack.c.0.s8 %v718
        %v720 = vlaneseq
        %v721 = vshrl.u32 %v720, 7
        %v722 = vsub.s32 %v719, %v721
        %v723 = vrot.slane %v716, %v722
        %v725 = vadd.f32 %v706, %v723
        %726 = vst.msk [vmem:[#allocation4] sm:$0x3] %vm681, %v725
        // Predicated region
        $region49: #{tpu_custom_call.1} parent=43 // pred_check
          %p727 = pneg %p335
        $region50: #{tpu_custom_call.1} parent=43 // pred_check_branch
          %729 = sbr.rel (%p727) target = $region52
        $region51: #{tpu_custom_call.1} parent=43 // pred_region
          %v730 = vld [vmem:[#allocation2] sm:$0x3]
          %v732 = vlaneseq
          %v733 = vshrl.u32 %v732, 7
          %v734 = vsub.s32 0, %v733
          %v735 = vrot.slane %v730, %v734
          %v736 = vlaneseq
          %v737 = vshrl.u32 %v736, 7
          %v738 = vsub.s32 1, %v737
          %v739 = vrot.slane %v730, %v738
          %vm742 = vcmask 1040384
          %v743 = vsel %vm742, %v735, 0.0
          %v744 = vsel %vm742, %v739, 0.0
          %v745 = vadd.f32 %v743, %v744
          %746 = vadd.xlane.f32.xlu0 %v745
          %v747 = vpop.xlane.xlu0 %746
          %v748 = vrot.slane %v747, 4
          %v749 = vadd.f32 %v747, %v748
          %v750 = vrot.slane %v749, 2
          %v751 = vadd.f32 %v749, %v750
          %v752 = vrot.slane %v751, 1
          %v753 = vadd.f32 %v751, %v752
          %s754 = vtos %v753
          %s755 = scalar_lea.smem %s311, 0 [#allocation6]
          %756 = sst [smem:[%s755]] %s754
          %v757 = vld [vmem:[#allocation3] sm:$0x3]
          %v759 = vlaneseq
          %v760 = vshrl.u32 %v759, 7
          %v761 = vsub.s32 0, %v760
          %v762 = vrot.slane %v757, %v761
          %v763 = vlaneseq
          %v764 = vshrl.u32 %v763, 7
          %v765 = vsub.s32 1, %v764
          %v766 = vrot.slane %v757, %v765
          %v769 = vsel %vm742, %v762, 0.0
          %v770 = vsel %vm742, %v766, 0.0
          %v771 = vadd.f32 %v769, %v770
          %772 = vadd.xlane.f32.xlu0 %v771
          %v773 = vpop.xlane.xlu0 %772
          %v774 = vrot.slane %v773, 4
          %v775 = vadd.f32 %v773, %v774
          %v776 = vrot.slane %v775, 2
          %v777 = vadd.f32 %v775, %v776
          %v778 = vrot.slane %v777, 1
          %v779 = vadd.f32 %v777, %v778
          %s780 = vtos %v779
          %s781 = scalar_lea.smem %s311, 1 [#allocation6]
          %782 = sst [smem:[%s781]] %s780
          %v783 = vld [vmem:[#allocation4] sm:$0x3]
          %v785 = vlaneseq
          %v786 = vshrl.u32 %v785, 7
          %v787 = vsub.s32 0, %v786
          %v788 = vrot.slane %v783, %v787
          %v789 = vlaneseq
          %v790 = vshrl.u32 %v789, 7
          %v791 = vsub.s32 1, %v790
          %v792 = vrot.slane %v783, %v791
          %v795 = vsel %vm742, %v788, 0.0
          %v796 = vsel %vm742, %v792, 0.0
          %v797 = vadd.f32 %v795, %v796
          %798 = vadd.xlane.f32.xlu0 %v797
          %v799 = vpop.xlane.xlu0 %798
          %v800 = vrot.slane %v799, 4
          %v801 = vadd.f32 %v799, %v800
          %v802 = vrot.slane %v801, 2
          %v803 = vadd.f32 %v801, %v802
          %v804 = vrot.slane %v803, 1
          %v805 = vadd.f32 %v803, %v804
          %s806 = vtos %v805
          %s807 = scalar_lea.smem %s311, 2 [#allocation6]
          %808 = sst [smem:[%s807]] %s806
        $region52: #{tpu_custom_call.1} parent=43 // pred_fallthru
          _
        %s809 = sand.u32 %s194, 1
        %s810 = scalar_lea.sflag [#allocation7], %s809
        %s811 = sand.u32 %s194, 1
        %s812 = smul.addr %s811, 128
        %s813 = scalar_lea.smem [#allocation6], %s812
        // Predicated region
        $region53: #{tpu_custom_call.1} parent=43 // pred_check
          %p814 = pneg %p204
        $region54: #{tpu_custom_call.1} parent=43 // pred_check_branch
          %816 = sbr.rel (%p814) target = $region56
        $region55: #{tpu_custom_call.1} parent=43 // pred_region
          %s818 = ssub.s32 16, 16
          %819 = vsyncadd %s810, %s818
          %s820 = sadd.s32 %s27, %s26
          %s821 = smul.addr %s820, 16
          %s822 = scalar_lea.hbm %s6, %s821
          %825 = dma.smem_to_hbm %s813, 16, %s822, %s810
        $region56: #{tpu_custom_call.1} parent=43 // pred_fallthru
          _
      $region44: #{tpu_custom_call.1} parent=5 // pred_fallthru
        _
      %p826 = scmp.le.s32.totalorder 2, %s16
      // Predicated region
      $region57: #{tpu_custom_call.1} parent=5 // pred_check
        %p827 = pneg %p826
      $region58: #{tpu_custom_call.1} parent=5 // pred_check_branch
        %829 = sbr.rel (%p827) target = $region60
      $region59: #{tpu_custom_call.1} parent=5 // pred_region
        %s830 = ssub.s32 %s16, 2
        // Predicated region
        $region61: #{tpu_custom_call.1} parent=59 // pred_check
          %p831 = pneg %p210
        $region62: #{tpu_custom_call.1} parent=59 // pred_check_branch
          %833 = sbr.rel (%p831) target = $region64
        $region63: #{tpu_custom_call.1} parent=59 // pred_region
          %s834 = sand.u32 %s195, 1
          %s835 = scalar_lea.sflag [#allocation7], %s834
          %s836 = sand.u32 %s195, 1
          %s837 = smul.addr %s836, 128
          %s838 = scalar_lea.smem [#allocation6], %s837
          %839 = dma.done %s835, 16
        $region64: #{tpu_custom_call.1} parent=59 // pred_fallthru
          _
        %840 = sfence
      $region60: #{tpu_custom_call.1} parent=5 // pred_fallthru
        _
    $region6: #{tpu_custom_call.1} parent=1 // loop_footer
      %s20 = sadd.s32 1, %s16
    $region7: #{tpu_custom_call.1} parent=1 // loop_footer_branch
      %15 = sbr.rel target = $region3
    $region8: #{tpu_custom_call.1} parent=1 // loop_exit
      _
    %841 = vsyncpa [#allocation7], 1
    %s842 = scalar_lea.sflag [#allocation7], 1
    %843 = vsyncpa %s842, 1

</llo_original>
